<compile_context>
chip_gen: v7x
topology: tpu7x:2x2x1
jax: 0.10.0
libtpu: 0.0.40
codegen_flags: <defaults>
</compile_context>

<pallas_src>
import math
from functools import partial

import jax
import jax.numpy as jnp
from jax import lax
from jax.experimental import pallas as pl
from jax.experimental.pallas import tpu as pltpu


def _round_up(v, m):
    return (v + m - 1) // m * m


def _vmem_capacity_bytes():
    """Physical VMEM per TensorCore; conservative 64 MiB (v7x) fallback."""
    try:
        info = pltpu.get_tpu_info()
        cap = getattr(info, "vmem_capacity_bytes", None)
        if cap:
            return int(cap)
    except Exception:
        pass
    return 64 * 1024 * 1024


def _softplus(x):
    # stable log(1 + exp(x))
    return jnp.maximum(x, 0.0) + jnp.log(1.0 + jnp.exp(-jnp.abs(x)))


def _finalize(ssq, la, b, n_feat):
    """Global sum-of-squares + scalar params -> (beta*h, log_det)."""
    r = jnp.sqrt(ssq)
    exp_la = jnp.exp(la)
    beta = -exp_la + _softplus(b)
    h = 1.0 / (exp_la + r)
    bh = beta * h
    log_det = (n_feat - 1) * jnp.log(1.0 + bh) + jnp.log(1.0 + bh - beta * r * h * h)
    return bh, log_det


# ----------------------------------------------------------------------------
# Path 1: single fused block (tiny arrays).
# ----------------------------------------------------------------------------
def _radial_single_kernel(x_ref, x0_ref, la_ref, b_ref, z_ref, ld_ref, *, n_feat):
    x = x_ref[...].astype(jnp.float32)
    diff = x - x0_ref[...]
    ssq = jnp.sum(diff * diff)                              # rank-0
    la = jnp.full((1, 1), la_ref[0], dtype=jnp.float32)
    b = jnp.full((1, 1), b_ref[0], dtype=jnp.float32)
    bh, log_det = _finalize(ssq, la, b, n_feat)             # (1,1)
    z_ref[...] = (x + bh * diff).astype(z_ref.dtype)
    ld_ref[...] = log_det


# ----------------------------------------------------------------------------
# Path 2: single pipelined call over a (phase=2, tiles) grid.
#   phase 0: stream x in, lane-wise accumulate ||x-x0||^2, stage tiles in VMEM.
#   phase 1: read staged tiles, z = scale*x + offset, stream z out.
# ----------------------------------------------------------------------------
def _radial_staged_kernel(x_ref, x0_ref, la_ref, b_ref, z_ref, ld_ref,
                          stage_ref, acc_ref, coef_ref, *, n_feat, tile_r, n_rows):
    p = pl.program_id(0)                 # phase
    t = pl.program_id(1)                 # row-tile index
    n_tiles = pl.num_programs(1)

    @pl.when(p == 0)
    def _reduce_and_stage():
        @pl.when(t == 0)
        def _():
            acc_ref[...] = jnp.zeros_like(acc_ref)

        x = x_ref[...]                                   # native dtype tile
        stage_ref[t] = x                                 # stage for phase 1
        diff = x.astype(jnp.float32) - x0_ref[...]
        d2 = diff * diff
        # rows past the true extent (partial last tile) hold garbage -> mask
        row = t * tile_r + lax.broadcasted_iota(jnp.int32, d2.shape, 0)
        d2 = jnp.where(row < n_rows, d2, 0.0)
        acc_ref[...] += jnp.sum(d2, axis=0, keepdims=True)   # lane-wise acc

        @pl.when(t == n_tiles - 1)
        def _finalize_scalars():
            ssq = jnp.sum(acc_ref[...])                  # one XLU reduce total
            la = jnp.full((1, 1), la_ref[0], dtype=jnp.float32)
            b = jnp.full((1, 1), b_ref[0], dtype=jnp.float32)
            bh, log_det = _finalize(ssq, la, b, n_feat)
            ld_ref[...] = log_det
            # z = (1 + bh)*x + (-bh*x0): only 2 VALU ops per vreg in phase 1
            coef_ref[0:1, :] = jnp.broadcast_to(1.0 + bh, acc_ref.shape)
            coef_ref[1:2, :] = (-bh) * x0_ref[...]

    @pl.when(p == 1)
    def _map():
        xs = stage_ref[t].astype(jnp.float32)
        z_ref[...] = (coef_ref[0:1, :] * xs + coef_ref[1:2, :]).astype(z_ref.dtype)


# ----------------------------------------------------------------------------
# Path 3 (too big to stage in VMEM): two streaming passes, both "parallel".
# ----------------------------------------------------------------------------
def _radial_partial_kernel(x_ref, x0_ref, part_ref, *, tile_r, n_rows):
    t = pl.program_id(0)
    diff = x_ref[...].astype(jnp.float32) - x0_ref[...]
    d2 = diff * diff
    row = t * tile_r + lax.broadcasted_iota(jnp.int32, d2.shape, 0)
    d2 = jnp.where(row < n_rows, d2, 0.0)
    part_ref[...] = jnp.sum(d2, axis=0, keepdims=True)[None]    # (1,1,C)


def _radial_map_kernel(scale_ref, x_ref, off_ref, z_ref):
    s = scale_ref[0]                                     # SMEM scalar
    z_ref[...] = (s * x_ref[...].astype(jnp.float32) + off_ref[...]).astype(z_ref.dtype)


# ----------------------------------------------------------------------------
# Wrapper.
# ----------------------------------------------------------------------------
def radial_forward(x, x0, log_alpha, beta_raw, *,
                   tiny_bytes=2 << 20,
                   target_tile_bytes=1 << 20,
                   stage_limit_bytes=None):
    """x: (m, n); x0: (n,); log_alpha, beta_raw: (1,). Returns (z, log_det)."""
    m, n = x.shape
    la = jnp.asarray(log_alpha, dtype=jnp.float32).reshape(1)
    br = jnp.asarray(beta_raw, dtype=jnp.float32).reshape(1)
    x0_f32 = jnp.asarray(x0, dtype=jnp.float32)

    # ---- lane-dense re-layout (contiguous reshape: no copy, unmasked vst) ----
    if n <= 128 and 128 % n == 0 and (m * n) % 128 == 0:
        R, C = (m * n) // 128, 128
        x_l = x.reshape(R, C)
        x0_l = jnp.tile(x0_f32, 128 // n).reshape(1, C)
    else:
        R, C = m, n
        x_l = x
        x0_l = x0_f32.reshape(1, n)
        # TODO(synk): for n % 128 != 0 the streaming stores are lane-masked;
        # pad the lane axis to 128 if that ever dominates.

    itemsize = x.dtype.itemsize
    x_bytes = R * C * itemsize

    cap = _vmem_capacity_bytes()
    if stage_limit_bytes is None:
        # staged-path budget: ~24 MiB input on v7x (64 MiB VMEM), ~56 MiB on v5e/v6e
        stage_limit_bytes = max(8 << 20, cap // 2 - (8 << 20))

    # streaming row-tile: ~target_tile_bytes of input per tile, multiple of 8 rows
    tile_r = (target_tile_bytes // (C * itemsize)) // 8 * 8
    tile_r = max(8, min(2048, tile_r))
    tile_r = min(tile_r, _round_up(R, 8))
    tile_nat = tile_r * C * itemsize
    tile_f32 = tile_r * C * 4
    stream_need = 4 * tile_nat + 4 * tile_f32 + (2 << 20)   # dbl-buffers + temps

    if x_bytes <= tiny_bytes or stream_need > cap - (2 << 20):
        # ------------------------- path 1: one fused block -------------------
        # TODO(synk): rows wider than ~VMEM would also need column tiling;
        # such degenerate shapes land here as a best-effort single block.
        vlim = int(min(cap - (1 << 20),
                       max(32 << 20, 3 * x_bytes + 3 * R * C * 4 + (4 << 20))))
        z_l, ld = pl.pallas_call(
            partial(_radial_single_kernel, n_feat=n),
            out_shape=(jax.ShapeDtypeStruct((R, C), x.dtype),
                       jax.ShapeDtypeStruct((1, 1), jnp.float32)),
            in_specs=[
                pl.BlockSpec((R, C), lambda: (0, 0)),
                pl.BlockSpec((1, C), lambda: (0, 0)),
                pl.BlockSpec(memory_space=pltpu.MemorySpace.SMEM),
                pl.BlockSpec(memory_space=pltpu.MemorySpace.SMEM),
            ],
            out_specs=(pl.BlockSpec((R, C), lambda: (0, 0)),
                       pl.BlockSpec((1, 1), lambda: (0, 0))),
            compiler_params=pltpu.CompilerParams(vmem_limit_bytes=vlim),
        )(x_l, x0_l, la, br)
    else:
        T = -(-R // tile_r)                  # partial last tile is row-masked
        stage_bytes = T * tile_nat
        if stage_bytes <= stage_limit_bytes:
            # --------------------- path 2: staged, read/write-once -----------
            vlim = int(min(cap - (1 << 20),
                           max(32 << 20, stage_bytes + stream_need + (4 << 20))))
            x_map = lambda p, t: (t * (1 - p) + (T - 1) * p, 0)   # ph1: pinned
            z_map = lambda p, t: (t * p, 0)                       # ph0: pinned
            z_l, ld = pl.pallas_call(
                partial(_radial_staged_kernel, n_feat=n, tile_r=tile_r, n_rows=R),
                grid=(2, T),
                out_shape=(jax.ShapeDtypeStruct((R, C), x.dtype),
                           jax.ShapeDtypeStruct((1, 1), jnp.float32)),
                in_specs=[
                    pl.BlockSpec((tile_r, C), x_map),
                    pl.BlockSpec((1, C), lambda p, t: (0, 0)),
                    pl.BlockSpec(memory_space=pltpu.MemorySpace.SMEM),
                    pl.BlockSpec(memory_space=pltpu.MemorySpace.SMEM),
                ],
                out_specs=(pl.BlockSpec((tile_r, C), z_map),
                           pl.BlockSpec((1, 1), lambda p, t: (0, 0))),
                scratch_shapes=[
                    pltpu.VMEM((T, tile_r, C), x.dtype),    # staged copy of x
                    pltpu.VMEM((1, C), jnp.float32),        # lane-wise ssq acc
                    pltpu.VMEM((2, C), jnp.float32),        # [scale ; offset]
                ],
                compiler_params=pltpu.CompilerParams(
                    dimension_semantics=("arbitrary", "arbitrary"),
                    vmem_limit_bytes=vlim),
            )(x_l, x0_l, la, br)
        else:
            # --------------------- path 3: two streaming passes --------------
            vlim = int(min(cap - (1 << 20), max(32 << 20, stream_need + (4 << 20))))
            cparams = pltpu.CompilerParams(dimension_semantics=("parallel",),
                                           vmem_limit_bytes=vlim)
            partials = pl.pallas_call(
                partial(_radial_partial_kernel, tile_r=tile_r, n_rows=R),
                grid=(T,),
                out_shape=jax.ShapeDtypeStruct((T, 1, C), jnp.float32),
                in_specs=[pl.BlockSpec((tile_r, C), lambda t: (t, 0)),
                          pl.BlockSpec((1, C), lambda t: (0, 0))],
                out_specs=pl.BlockSpec((1, 1, C), lambda t: (t, 0, 0)),
                compiler_params=cparams,
            )(x_l, x0_l)

            bh, log_det = _finalize(jnp.sum(partials), la[0], br[0], n)
            scale = (1.0 + bh).astype(jnp.float32).reshape(1)
            offset = ((-bh) * x0_l).astype(jnp.float32)             # (1, C)
            ld = log_det

            z_l = pl.pallas_call(
                _radial_map_kernel,
                grid=(T,),
                out_shape=jax.ShapeDtypeStruct((R, C), x.dtype),
                in_specs=[pl.BlockSpec(memory_space=pltpu.MemorySpace.SMEM),
                          pl.BlockSpec((tile_r, C), lambda t: (t, 0)),
                          pl.BlockSpec((1, C), lambda t: (0, 0))],
                out_specs=pl.BlockSpec((tile_r, C), lambda t: (t, 0)),
                compiler_params=cparams,
            )(scale, x_l, offset)

    z = z_l.reshape(m, n) if (R, C) != (m, n) else z_l
    return z, ld.reshape(1)


def radial_reference(x, x0, log_alpha, beta_raw):
    """Pure-JAX mirror of the PyTorch forward."""
    m, n = x.shape
    xf = x.astype(jnp.float32)
    diff = xf - x0[None, :].astype(jnp.float32)
    r = jnp.sqrt(jnp.sum(diff * diff))
    exp_la = jnp.exp(log_alpha[0].astype(jnp.float32))
    h = 1.0 / (exp_la + r)
    beta = -exp_la + jnp.log(1.0 + jnp.exp(beta_raw[0].astype(jnp.float32)))
    z = xf + beta * h * diff
    log_det = (n - 1) * jnp.log(1.0 + beta * h) + jnp.log(
        1.0 + beta * h - beta * r / (exp_la + r) ** 2)
    return z.astype(x.dtype), log_det.reshape(1)


if __name__ == "__main__":
    key = jax.random.PRNGKey(0)

    def run_case(mm, nn, tol, **kw):
        kx, k0, ka, kb = jax.random.split(jax.random.fold_in(key, mm * 1000 + nn), 4)
        bound = math.sqrt(1.0 / nn)        # reset_parameters-style uniform init
        xx = jax.random.normal(kx, (mm, nn), dtype=jnp.float32)
        x0_ = jax.random.uniform(k0, (nn,), minval=-bound, maxval=bound,
                                 dtype=jnp.float32)
        la_ = jax.random.uniform(ka, (1,), minval=-bound, maxval=bound,
                                 dtype=jnp.float32)
        b_ = jax.random.uniform(kb, (1,), minval=-bound, maxval=bound,
                                dtype=jnp.float32)
        z, ld = radial_forward(xx, x0_, la_, b_, **kw)
        jax.block_until_ready((z, ld))
        z_r, ld_r = radial_reference(xx, x0_, la_, b_)
        assert z.shape == (mm, nn) and ld.shape == (1,)
        assert jnp.allclose(z, z_r, atol=tol, rtol=tol), f"z mismatch ({mm},{nn})"
        assert jnp.allclose(ld, ld_r, atol=tol, rtol=tol), f"log_det mismatch ({mm},{nn})"

    # path 1: tiny fused single block (lane-dense relayout)
    run_case(8, 32, 1e-5)

    # path 2: staged pipelined single call (thresholds shrunk to force it)
    run_case(4096, 32, 1e-4, tiny_bytes=64 * 1024, target_tile_bytes=128 * 1024)

    # path 3: two-pass streaming fallback ("parallel" reduce + map)
    run_case(4096, 32, 1e-4, tiny_bytes=64 * 1024, target_tile_bytes=128 * 1024,
             stage_limit_bytes=64 * 1024)

    # awkward shape: no lane-dense relayout, partial (row-masked) last tile
    run_case(1000, 48, 1e-4, tiny_bytes=16 * 1024, target_tile_bytes=64 * 1024)

    print("KERNEL_OK")
</pallas_src>

<mosaic_0001>
module attributes {stable_mosaic.version = 11 : i64} {
  func.func @_radial_single_kernel(%arg0: memref<2x128xf32, #tpu.memory_space<vmem>>, %arg1: memref<1x128xf32, #tpu.memory_space<vmem>>, %arg2: memref<1xf32, #tpu.memory_space<smem>>, %arg3: memref<1xf32, #tpu.memory_space<smem>>, %arg4: memref<2x128xf32, #tpu.memory_space<vmem>>, %arg5: memref<1x1xf32, #tpu.memory_space<vmem>>) attributes {dimension_semantics = [], scalar_prefetch = 0 : i64, scratch_operands = 0 : i64, tpu.core_type = #tpu.core_type<tc>} {
    %c0 = arith.constant 0 : index
    %c0_0 = arith.constant 0 : index
    %0 = vector.load %arg0[%c0, %c0_0] : memref<2x128xf32, #tpu.memory_space<vmem>>, vector<2x128xf32>
    %c0_1 = arith.constant 0 : index
    %c0_2 = arith.constant 0 : index
    %1 = vector.load %arg1[%c0_1, %c0_2] : memref<1x128xf32, #tpu.memory_space<vmem>>, vector<1x128xf32>
    %2 = vector.broadcast %1 : vector<1x128xf32> to vector<2x128xf32>
    %3 = arith.subf %0, %2 : vector<2x128xf32>
    %4 = arith.mulf %3, %3 : vector<2x128xf32>
    %5 = vector.shape_cast %4 : vector<2x128xf32> to vector<1x2x128xf32>
    %cst = arith.constant dense<0.000000e+00> : vector<1xf32>
    %6 = vector.multi_reduction <add>, %5, %cst [1, 2] : vector<1x2x128xf32> to vector<1xf32>
    %7 = vector.shape_cast %6 : vector<1xf32> to vector<1x1x1xf32>
    %8 = vector.extract %7[0, 0, 0] : f32 from vector<1x1x1xf32>
    %c0_3 = arith.constant 0 : index
    %9 = memref.load %arg2[%c0_3] : memref<1xf32, #tpu.memory_space<smem>>
    %10 = vector.broadcast %9 : f32 to vector<1x1xf32>
    %c0_4 = arith.constant 0 : index
    %11 = memref.load %arg3[%c0_4] : memref<1xf32, #tpu.memory_space<smem>>
    %12 = vector.broadcast %11 : f32 to vector<1x1xf32>
    %13 = math.sqrt %8 : f32
    %14 = math.exp %10 : vector<1x1xf32>
    %cst_5 = arith.constant 0.000000e+00 : f32
    %15 = vector.broadcast %cst_5 : f32 to vector<1x1xf32>
    %16 = arith.subf %15, %14 : vector<1x1xf32>
    %cst_6 = arith.constant 0.000000e+00 : f32
    %17 = vector.broadcast %cst_6 : f32 to vector<1x1xf32>
    %18 = arith.maximumf %12, %17 : vector<1x1xf32>
    %19 = math.absf %12 : vector<1x1xf32>
    %cst_7 = arith.constant 0.000000e+00 : f32
    %20 = vector.broadcast %cst_7 : f32 to vector<1x1xf32>
    %21 = arith.subf %20, %19 : vector<1x1xf32>
    %22 = math.exp %21 : vector<1x1xf32>
    %cst_8 = arith.constant 1.000000e+00 : f32
    %23 = vector.broadcast %cst_8 : f32 to vector<1x1xf32>
    %24 = arith.addf %23, %22 : vector<1x1xf32>
    %25 = math.log %24 : vector<1x1xf32>
    %26 = arith.addf %18, %25 : vector<1x1xf32>
    %27 = arith.addf %16, %26 : vector<1x1xf32>
    %28 = vector.broadcast %13 : f32 to vector<1x1xf32>
    %29 = arith.addf %14, %28 : vector<1x1xf32>
    %cst_9 = arith.constant 1.000000e+00 : f32
    %30 = vector.broadcast %cst_9 : f32 to vector<1x1xf32>
    %31 = arith.divf %30, %29 : vector<1x1xf32>
    %32 = arith.mulf %27, %31 : vector<1x1xf32>
    %cst_10 = arith.constant 1.000000e+00 : f32
    %33 = vector.broadcast %cst_10 : f32 to vector<1x1xf32>
    %34 = arith.addf %33, %32 : vector<1x1xf32>
    %35 = math.log %34 : vector<1x1xf32>
    %cst_11 = arith.constant 3.100000e+01 : f32
    %36 = vector.broadcast %cst_11 : f32 to vector<1x1xf32>
    %37 = arith.mulf %36, %35 : vector<1x1xf32>
    %cst_12 = arith.constant 1.000000e+00 : f32
    %38 = vector.broadcast %cst_12 : f32 to vector<1x1xf32>
    %39 = arith.addf %38, %32 : vector<1x1xf32>
    %40 = vector.broadcast %13 : f32 to vector<1x1xf32>
    %41 = arith.mulf %27, %40 : vector<1x1xf32>
    %42 = arith.mulf %41, %31 : vector<1x1xf32>
    %43 = arith.mulf %42, %31 : vector<1x1xf32>
    %44 = arith.subf %39, %43 : vector<1x1xf32>
    %45 = math.log %44 : vector<1x1xf32>
    %46 = arith.addf %37, %45 : vector<1x1xf32>
    %47 = vector.broadcast %32 : vector<1x1xf32> to vector<2x128xf32>
    %48 = arith.mulf %47, %3 : vector<2x128xf32>
    %49 = arith.addf %0, %48 : vector<2x128xf32>
    %c0_13 = arith.constant 0 : index
    %c0_14 = arith.constant 0 : index
    %50 = vector.load %arg4[%c0_13, %c0_14] : memref<2x128xf32, #tpu.memory_space<vmem>>, vector<2x128xf32>
    tpu.vector_store %arg4[%c0_13, %c0_14], %49 {strides = array<i32>} : memref<2x128xf32, #tpu.memory_space<vmem>>, vector<2x128xf32>,
    %c0_15 = arith.constant 0 : index
    %c0_16 = arith.constant 0 : index
    %51 = vector.load %arg5[%c0_15, %c0_16] : memref<1x1xf32, #tpu.memory_space<vmem>>, vector<1x1xf32>
    tpu.vector_store %arg5[%c0_15, %c0_16], %46 {strides = array<i32>} : memref<1x1xf32, #tpu.memory_space<vmem>>, vector<1x1xf32>,
    return
  }
}

</mosaic_0001>

<llo_original>
// kernel: tpu_custom_call.1
$region0: #{tpu_custom_call.1}
  #allocation0 [shape = 'u32[]', space=smem, size = 0x4, offset = 0x4, fixed_abs, tag = 'smem constant byte address 0x4 - core index']
  #allocation1 [shape = 'u32[144,128]{1,0:T(1,128)}', space=vmem, size = 0x12000, scoped, tag = 'internal scratch']
  #allocation2 [shape = 'f32[1]{0:T(128)S(6)}', space=smem, size = 0x200, scoped, tag = 'scoped memory for tpu_custom_call.1']
  #allocation3 [shape = 'f32[1]{0:T(128)S(6)}', space=smem, size = 0x200, scoped, tag = 'scoped memory for tpu_custom_call.1']
  %s0 = inlined_call_operand.vmem [shape: f32[2,128], index: 0, kind: input, shape index: {}]
  %s1 = inlined_call_operand.vmem [shape: f32[1,128], index: 1, kind: input, shape index: {}]
  %s2 = inlined_call_operand.<no memory space> [shape: f32[1], index: 2, kind: input, shape index: {}]
  %s3 = inlined_call_operand.<no memory space> [shape: f32[1], index: 3, kind: input, shape index: {}]
  %s4 = inlined_call_operand.hbm [shape: f32[2,128], index: 4, kind: output, shape index: {0}]
  %s5 = inlined_call_operand.hbm [shape: f32[1,1], index: 5, kind: output, shape index: {1}]
  %6 = xla_tuple %s4, %s5
  %s7 = sld [smem:[#allocation0]]
  $region34: #{tpu_custom_call.1} parent=0
    _
  %s9 = ssub.s32 1, %s7
  %s10 = scalar_select 0, %s9, %s7
  %11 = sst [smem:[#allocation2]] %s2
  %12 = sst [smem:[#allocation3]] %s3
  $region1: #{tpu_custom_call.1} parent=0
    #allocation4 [shape = 'u8[1024]{0}', space=vmem, size = 0x400, scoped, tag = 'output window, operand 0, single buffered']
    #allocation5 [shape = 's32[1]{0}', space=sflag, size = 0x4, scoped, tag = 'scoped memory for tpu_custom_call.1']
    #allocation6 [shape = 'u8[512]{0}', space=vmem, size = 0x400, scoped, tag = 'output window, operand 1, single buffered']
    #allocation7 [shape = 's32[1]{0}', space=sflag, size = 0x4, scoped, tag = 'scoped memory for tpu_custom_call.1']
    %13 = vsyncpa [#allocation5], 0
    %14 = vsyncpa [#allocation7], 0
    // Predicated region
    $region2: #{tpu_custom_call.1} parent=1 // pred_check
      _
    $region3: #{tpu_custom_call.1} parent=1 // pred_check_branch
      %16 = sbr.rel (0) target = $region5
    $region4: #{tpu_custom_call.1} parent=1 // pred_region
      _
    $region5: #{tpu_custom_call.1} parent=1 // pred_fallthru
      _
    // Predicated region
    $region6: #{tpu_custom_call.1} parent=1 // pred_check
      _
    $region7: #{tpu_custom_call.1} parent=1 // pred_check_branch
      %18 = sbr.rel (0) target = $region9
    $region8: #{tpu_custom_call.1} parent=1 // pred_region
      _
    $region9: #{tpu_custom_call.1} parent=1 // pred_fallthru
      _
    // Predicated region
    $region10: #{tpu_custom_call.1} parent=1 // pred_check
      _
    $region11: #{tpu_custom_call.1} parent=1 // pred_check_branch
      %20 = sbr.rel (0) target = $region13
    $region12: #{tpu_custom_call.1} parent=1 // pred_region
      _
    $region13: #{tpu_custom_call.1} parent=1 // pred_fallthru
      _
    // Predicated region
    $region14: #{tpu_custom_call.1} parent=1 // pred_check
      _
    $region15: #{tpu_custom_call.1} parent=1 // pred_check_branch
      %22 = sbr.rel (0) target = $region17
    $region16: #{tpu_custom_call.1} parent=1 // pred_region
      _
    $region17: #{tpu_custom_call.1} parent=1 // pred_fallthru
      _
    %v23 = vld [vmem:[%s0] sm:$0x3]
    %v24 = vld [vmem:[%s1] sm:$0x1]
    %v26 = vlaneseq
    %v27 = vshrl.u32 %v26, 7
    %v28 = vsub.s32 0, %v27
    %v29 = vrot.slane %v24, %v28
    %v31 = vsub.f32 %v23, %v29
    %v32 = vmul.f32 %v31, %v31
    %vm33 = vcmask 1041408
    %v34 = vsel %vm33, %v32, 0.0
    %35 = vadd.xlane.f32.xlu0 %v34
    %v36 = vpop.xlane.xlu0 %35
    %v37 = vrot.slane %v36, 4
    %v38 = vadd.f32 %v36, %v37
    %v39 = vrot.slane %v38, 2
    %v40 = vadd.f32 %v38, %v39
    %v41 = vrot.slane %v40, 1
    %v42 = vadd.f32 %v40, %v41
    %s43 = vtos %v42
    %s44 = sld [smem:[#allocation2]]
    %v45 = vstv %s44
    %s46 = sld [smem:[#allocation3]]
    %v47 = vstv %s46
    %v48 = vstv %s43
    %v49 = vrsqrt.pop %v48
    %v50 = vmul.f32 %v48, %v49
    %vm51 = vcmp.eq.f32.partialorder %v48, inf
    %v52 = vsel %vm51, %v48, %v50
    %vm53 = vcmp.eq.f32.partialorder %v48, 0.0
    %v54 = vand.u32 %v48, 2147483648
    %v55 = vsel %vm53, %v54, %v52
    %s56 = vtos %v55
    %v57 = vmul.f32 %v45, 1.442695
    %v58 = vpow.pop %v57
    %v59 = vsub.f32 0.0, %v58
    %v60 = vmax.f32 %v47, 0.0
    %v61 = vand.u32 2147483647, %v47
    %v62 = vsub.f32 0.0, %v61
    %v63 = vmul.f32 %v62, 1.442695
    %v64 = vpow.pop %v63
    %v65 = vadd.f32 %v64, 1.0
    %v66 = vlog2.pop %v65
    %v67 = vmul.f32 %v66, 0.6931472
    %v68 = vadd.f32 %v60, %v67
    %v69 = vadd.f32 %v59, %v68
    %v70 = vstv %s56
    %v71 = vadd.f32 %v58, %v70
    %v72 = vrcp.pop %v71
    %v73 = vmul.f32 1.0, %v72
    %v74 = vmul.f32 %v69, %v73
    %v75 = vadd.f32 %v74, 1.0
    %v76 = vlog2.pop %v75
    %v77 = vmul.f32 %v76, 0.6931472
    %v78 = vmul.f32 %v77, 31.0
    %v79 = vmul.f32 %v69, %v70
    %v80 = vmul.f32 %v79, %v73
    %v81 = vmul.f32 %v80, %v73
    %v82 = vsub.f32 %v75, %v81
    %v83 = vlog2.pop %v82
    %v84 = vmul.f32 %v83, 0.6931472
    %v85 = vadd.f32 %v78, %v84
    %v86 = vmul.f32 %v74, %v31
    %v87 = vadd.f32 %v23, %v86
    %88 = vst [vmem:[#allocation4] sm:$0x3] %v87
    %vm89 = vcmask 0
    %90 = vst.msk [vmem:[#allocation6] sm:$0x1] %vm89, %v85
    // Predicated region
    $region18: #{tpu_custom_call.1} parent=1 // pred_check
      _
    $region19: #{tpu_custom_call.1} parent=1 // pred_check_branch
      %92 = sbr.rel (0) target = $region21
    $region20: #{tpu_custom_call.1} parent=1 // pred_region
      %s94 = ssub.s32 32, 32
      %95 = vsyncadd [#allocation5], %s94
      %s97 = sshll.u32 [#allocation4], 4
      %s98 = int_to_ptr.vmem [resolvable:$true] %s97
      %100 = dma.vmem_to_hbm [thread:$0]  %s98, 32, %s4, [#allocation5]
    $region21: #{tpu_custom_call.1} parent=1 // pred_fallthru
      _
    // Predicated region
    $region22: #{tpu_custom_call.1} parent=1 // pred_check
      _
    $region23: #{tpu_custom_call.1} parent=1 // pred_check_branch
      %102 = sbr.rel (0) target = $region25
    $region24: #{tpu_custom_call.1} parent=1 // pred_region
      %s104 = ssub.s32 16, 16
      %105 = vsyncadd [#allocation7], %s104
      %s107 = sshll.u32 [#allocation6], 4
      %s108 = int_to_ptr.vmem [resolvable:$true] %s107
      %110 = dma.vmem_to_hbm [thread:$0]  %s108, 16, %s5, [#allocation7]
    $region25: #{tpu_custom_call.1} parent=1 // pred_fallthru
      _
    // Predicated region
    $region26: #{tpu_custom_call.1} parent=1 // pred_check
      _
    $region27: #{tpu_custom_call.1} parent=1 // pred_check_branch
      %112 = sbr.rel (0) target = $region29
    $region28: #{tpu_custom_call.1} parent=1 // pred_region
      %113 = dma.done [#allocation5], 32
    $region29: #{tpu_custom_call.1} parent=1 // pred_fallthru
      _
    // Predicated region
    $region30: #{tpu_custom_call.1} parent=1 // pred_check
      _
    $region31: #{tpu_custom_call.1} parent=1 // pred_check_branch
      %115 = sbr.rel (0) target = $region33
    $region32: #{tpu_custom_call.1} parent=1 // pred_region
      %116 = dma.done [#allocation7], 16
    $region33: #{tpu_custom_call.1} parent=1 // pred_fallthru
      _
    %117 = vsyncpa [#allocation5], 1
    %118 = vsyncpa [#allocation7], 1

</llo_original>
